<compile_context>
chip_gen: v5e
topology: v5e:2x2
jax: 0.10.0
libtpu: 0.0.40
codegen_flags: <defaults>
</compile_context>

<pallas_src>
import functools

import jax
import jax.numpy as jnp
from jax.experimental import pallas as pl
from jax.experimental.pallas import tpu as pltpu

LANE = 128
SUBLANE = 8


def _dice_kernel(p_ref, t_ref, out_ref, *, n_valid, block_rows, chunk_rows,
                 num_chunks, unroll, steps_per_part, full_blocks, has_tail,
                 approx_sigmoid):
    """Accumulate per-lane partial sums of sigmoid(p)*t and sigmoid(p)+t.

    out_ref block: (1, 2, 8, 128) f32, resident across the inner ("arbitrary")
    grid axis. out[0, 0] holds the intersection partials, out[0, 1] the total.
    """
    c = pl.program_id(0)            # parallel part (megacore split on v7x)
    j = pl.program_id(1)            # sequential step within the part
    b = c * steps_per_part + j      # global block id (may point past the data)

    @pl.when(j == 0)
    def _():
        out_ref[...] = jnp.zeros_like(out_ref)

    def sigmoid(x):
        if approx_sigmoid:
            # exp and approx reciprocal both land on the EUP slot (v7x lever).
            return pl.reciprocal(1.0 + jnp.exp(-x), approx=True)
        return jax.nn.sigmoid(x)

    def chunk(ref, ci):
        r0 = pl.multiple_of(ci * chunk_rows, chunk_rows)
        return ref[pl.ds(r0, chunk_rows), :].astype(jnp.float32)

    def accumulate(get_mask):
        zero = jnp.zeros((SUBLANE, LANE), jnp.float32)

        def body(ci, carry):
            inter, tot = carry
            p = sigmoid(chunk(p_ref, ci))
            t = chunk(t_ref, ci)
            mask = get_mask(ci)
            if mask is not None:
                p = jnp.where(mask, p, 0.0)
                t = jnp.where(mask, t, 0.0)
            # Chunk-local (VPU) reduce into an (8, 128) vreg-shaped accumulator:
            # intermediates stay vreg-resident (chunk_rows=128 -> 16 vregs f32),
            # no block-sized VMEM temporaries, no per-step cross-lane reduce.
            inter = inter + (p * t).reshape(-1, SUBLANE, LANE).sum(axis=0)
            tot = tot + (p + t).reshape(-1, SUBLANE, LANE).sum(axis=0)
            return inter, tot

        inter, tot = jax.lax.fori_loop(0, num_chunks, body, (zero, zero),
                                       unroll=unroll)
        # Single out_ref update per grid step.
        out_ref[0, 0] += inter
        out_ref[0, 1] += tot

    if full_blocks > 0:
        @pl.when(b < full_blocks)
        def _():
            accumulate(lambda ci: None)

    if has_tail:
        @pl.when(b == full_blocks)
        def _():
            # Ragged tail block: mask out the wrapper's zero-pad and any
            # out-of-bounds garbage rows of a partial block.
            def tail_mask(ci):
                row = jax.lax.broadcasted_iota(jnp.int32, (chunk_rows, LANE), 0)
                lane = jax.lax.broadcasted_iota(jnp.int32, (chunk_rows, LANE), 1)
                idx = (b * block_rows + ci * chunk_rows + row) * LANE + lane
                return idx < n_valid
            accumulate(tail_mask)
    # Phantom steps (b beyond the real blocks, from the multi-part split) fall
    # through both branches and contribute nothing.


def _default_config():
    """Generation-aware (block_rows, num_parts) defaults."""
    try:
        kind = jax.devices()[0].device_kind.lower()
    except Exception:  # pragma: no cover - defensive
        kind = ""
    if "v5e" in kind or "v5 lite" in kind or "v5lite" in kind:
        # v5e: 16 MiB default scoped VMEM -> keep double-buffered inputs at 8 MiB.
        return 4096, 1
    if "7" in kind:
        # v7x: 2 TCs, 64 MiB VMEM, ~3.2 TB/s HBM -> biggest blocks, 2-way split.
        return 16384, 2
    # v6e / other single-TC chips: 128 MiB VMEM, plenty of headroom.
    return 8192, 1


def dice_loss(predictions, targets, smooth=1e-6, block_rows=None,
              num_parts=None, chunk_rows=128, approx_sigmoid=False):
    """Pallas implementation of DiceLoss.forward (returns a scalar f32)."""
    def_rows, def_parts = _default_config()
    if block_rows is None:
        block_rows = def_rows
    if num_parts is None:
        num_parts = def_parts

    p = predictions.reshape(-1)     # keep native dtype on the wire
    t = targets.reshape(-1)
    n = p.shape[0]
    assert t.shape[0] == n, "predictions and targets must have the same numel"

    # Pad the flat length up to a whole number of (8, 128) tiles. This is a
    # tiny (<1024-element) tail pad, skipped entirely in the common case where
    # numel already divides; padded elements are masked inside the kernel, so
    # zero-padding is exact even though sigmoid(0) != 0.
    sub = SUBLANE * LANE
    padded = pl.cdiv(n, sub) * sub
    if padded != n:
        p = jnp.pad(p, (0, padded - n))
        t = jnp.pad(t, (0, padded - n))

    rows = padded // LANE

    block_rows = int(min(block_rows, rows))
    block_rows = max(SUBLANE, (block_rows // SUBLANE) * SUBLANE)
    chunk_rows = int(min(chunk_rows, block_rows))
    chunk_rows = max(SUBLANE, (chunk_rows // SUBLANE) * SUBLANE)
    block_rows = (block_rows // chunk_rows) * chunk_rows   # whole chunks per block
    num_chunks = block_rows // chunk_rows
    unroll = min(8, num_chunks)                            # modest unroll for LLO
    block_elems = block_rows * LANE

    p2 = p.reshape(rows, LANE)      # lane-dense 2-D slab
    t2 = t.reshape(rows, LANE)

    total_blocks = pl.cdiv(rows, block_rows)
    steps_per_part = pl.cdiv(total_blocks, num_parts)

    def in_map(c, j):
        # Clamp phantom steps (when total_blocks doesn't split evenly across
        # parts) onto the last real block; the kernel skips their contribution.
        return (jnp.minimum(c * steps_per_part + j, total_blocks - 1), 0)

    kernel = functools.partial(
        _dice_kernel,
        n_valid=n,
        block_rows=block_rows,
        chunk_rows=chunk_rows,
        num_chunks=num_chunks,
        unroll=unroll,
        steps_per_part=steps_per_part,
        full_blocks=n // block_elems,
        has_tail=(n % block_elems) != 0,
        approx_sigmoid=approx_sigmoid,
    )

    # Honest VMEM budget: double-buffered inputs + double-buffered output
    # blocks + chunk-sized intermediates + slack.  Always set explicitly so the
    # large tiles compile on every generation; capped well under the v7x 64 MiB
    # physical ceiling.
    in_bytes = 2 * block_rows * LANE * (p2.dtype.itemsize + t2.dtype.itemsize)
    out_bytes = 2 * 2 * SUBLANE * LANE * 4
    scratch_bytes = 8 * chunk_rows * LANE * 4
    vmem_limit = int(min(max(in_bytes + out_bytes + scratch_bytes + (4 << 20),
                             16 << 20),
                         60 << 20))

    partials = pl.pallas_call(
        kernel,
        out_shape=jax.ShapeDtypeStruct((num_parts, 2, SUBLANE, LANE),
                                       jnp.float32),
        grid_spec=pltpu.PrefetchScalarGridSpec(
            num_scalar_prefetch=0,
            grid=(num_parts, steps_per_part),
            in_specs=[
                pl.BlockSpec((block_rows, LANE), in_map),
                pl.BlockSpec((block_rows, LANE), in_map),
            ],
            out_specs=pl.BlockSpec((1, 2, SUBLANE, LANE),
                                   lambda c, j: (c, 0, 0, 0)),
        ),
        compiler_params=pltpu.CompilerParams(
            dimension_semantics=("parallel", "arbitrary"),
            vmem_limit_bytes=vmem_limit,
        ),
    )(p2, t2)

    # Final tiny reduction (num_parts*8*128 partials per sum) + dice math in XLA.
    intersection = jnp.sum(partials[:, 0])
    total = jnp.sum(partials[:, 1])
    dice = (2.0 * intersection + smooth) / (total + smooth)
    return (1.0 - dice).astype(jnp.float32)


def _dice_loss_ref(predictions, targets, smooth=1e-6):
    p = jax.nn.sigmoid(predictions.astype(jnp.float32)).reshape(-1)
    t = targets.astype(jnp.float32).reshape(-1)
    intersection = jnp.sum(p * t)
    total = jnp.sum(p) + jnp.sum(t)
    dice = (2.0 * intersection + smooth) / (total + smooth)
    return 1.0 - dice


if __name__ == "__main__":
    key = jax.random.PRNGKey(0)
    k1, k2, k3, k4 = jax.random.split(key, 4)

    # Segmentation-head shaped logits / binary masks: (batch=2, channels=4, 16, 16).
    predictions = jax.random.normal(k1, (2, 4, 16, 16), dtype=jnp.float32)
    targets = (jax.random.uniform(k2, (2, 4, 16, 16)) > 0.5).astype(jnp.float32)

    loss = jax.block_until_ready(dice_loss(predictions, targets))
    ref = _dice_loss_ref(predictions, targets)
    assert jnp.allclose(loss, ref, atol=1e-5, rtol=1e-5), (loss, ref)

    # Ragged size (numel not a multiple of 8*128) exercising the in-kernel tail mask.
    p_odd = jax.random.normal(k3, (2, 3, 13, 17), dtype=jnp.float32)
    t_odd = (jax.random.uniform(k4, (2, 3, 13, 17)) > 0.5).astype(jnp.float32)
    loss_odd = jax.block_until_ready(dice_loss(p_odd, t_odd))
    ref_odd = _dice_loss_ref(p_odd, t_odd)
    assert jnp.allclose(loss_odd, ref_odd, atol=1e-5, rtol=1e-5), (loss_odd, ref_odd)

    print("KERNEL_OK")
</pallas_src>

<mosaic_0001>
module attributes {stable_mosaic.version = 11 : i64} {
  func.func @_dice_kernel(%arg0: i32, %arg1: i32, %arg2: memref<16x128xf32, #tpu.memory_space<vmem>>, %arg3: memref<16x128xf32, #tpu.memory_space<vmem>>, %arg4: memref<1x2x8x128xf32, #tpu.memory_space<vmem>>) attributes {dimension_semantics = [#tpu.dimension_semantics<parallel>, #tpu.dimension_semantics<arbitrary>], iteration_bounds = array<i64: 1, 1>, scalar_prefetch = 0 : i64, scratch_operands = 0 : i64, tpu.core_type = #tpu.core_type<tc>, window_params = [{transform_indices = @transform_0, window_bounds = array<i64: 16, 128>}, {transform_indices = @transform_1, window_bounds = array<i64: 16, 128>}, {transform_indices = @transform_2, window_bounds = array<i64: 1, 2, 8, 128>}]} {
    %c1_i32 = arith.constant 1 : i32
    %0 = arith.muli %arg0, %c1_i32 : i32
    %1 = arith.addi %0, %arg1 : i32
    %c0_i32 = arith.constant 0 : i32
    %2 = arith.cmpi eq, %arg1, %c0_i32 : i32
    %3 = arith.extui %2 : i1 to i32
    %c0_i32_0 = arith.constant 0 : i32
    %4 = arith.cmpi ne, %3, %c0_i32_0 : i32
    scf.if %4 {
      %cst = arith.constant 0.000000e+00 : f32
      %8 = vector.broadcast %cst : f32 to vector<1x2x8x128xf32>
      %c0 = arith.constant 0 : index
      %c0_3 = arith.constant 0 : index
      %c0_4 = arith.constant 0 : index
      %c0_5 = arith.constant 0 : index
      %9 = vector.load %arg4[%c0, %c0_3, %c0_4, %c0_5] : memref<1x2x8x128xf32, #tpu.memory_space<vmem>>, vector<1x2x8x128xf32>
      tpu.vector_store %arg4[%c0, %c0_3, %c0_4, %c0_5], %8 {strides = array<i32>} : memref<1x2x8x128xf32, #tpu.memory_space<vmem>>, vector<1x2x8x128xf32>,
    } else {
    }
    %c1_i32_1 = arith.constant 1 : i32
    %5 = arith.cmpi slt, %1, %c1_i32_1 : i32
    %6 = arith.extui %5 : i1 to i32
    %c0_i32_2 = arith.constant 0 : i32
    %7 = arith.cmpi ne, %6, %c0_i32_2 : i32
    scf.if %7 {
      %cst = arith.constant 0.000000e+00 : f32
      %8 = vector.broadcast %cst : f32 to vector<8x128xf32>
      %c0_i32_3 = arith.constant 0 : i32
      %c16_i32 = arith.constant 16 : i32
      %9 = arith.muli %c0_i32_3, %c16_i32 : i32
      %10 = tpu.assume_multiple %9, 16 : i32
      %11 = arith.index_cast %10 : i32 to index
      %c0 = arith.constant 0 : index
      %12 = vector.load %arg2[%11, %c0] : memref<16x128xf32, #tpu.memory_space<vmem>>, vector<16x128xf32>
      %13 = arith.negf %12 : vector<16x128xf32>
      %14 = math.exp %13 : vector<16x128xf32>
      %cst_4 = arith.constant 1.000000e+00 : f32
      %15 = vector.broadcast %cst_4 : f32 to vector<16x128xf32>
      %16 = arith.addf %15, %14 : vector<16x128xf32>
      %17 = arith.divf %15, %16 : vector<16x128xf32>
      %c16_i32_5 = arith.constant 16 : i32
      %18 = arith.muli %c0_i32_3, %c16_i32_5 : i32
      %19 = tpu.assume_multiple %18, 16 : i32
      %20 = arith.index_cast %19 : i32 to index
      %c0_6 = arith.constant 0 : index
      %21 = vector.load %arg3[%20, %c0_6] : memref<16x128xf32, #tpu.memory_space<vmem>>, vector<16x128xf32>
      %22 = arith.mulf %17, %21 : vector<16x128xf32>
      %23 = vector.shape_cast %22 : vector<16x128xf32> to vector<2x8x128xf32>
      %cst_7 = arith.constant dense<0.000000e+00> : vector<8x128xf32>
      %24 = vector.multi_reduction <add>, %23, %cst_7 [0] : vector<2x8x128xf32> to vector<8x128xf32>
      %25 = arith.addf %8, %24 : vector<8x128xf32>
      %26 = arith.addf %17, %21 : vector<16x128xf32>
      %27 = vector.shape_cast %26 : vector<16x128xf32> to vector<2x8x128xf32>
      %cst_8 = arith.constant dense<0.000000e+00> : vector<8x128xf32>
      %28 = vector.multi_reduction <add>, %27, %cst_8 [0] : vector<2x8x128xf32> to vector<8x128xf32>
      %29 = arith.addf %8, %28 : vector<8x128xf32>
      %c1_i32_9 = arith.constant 1 : i32
      %c0_10 = arith.constant 0 : index
      %c0_11 = arith.constant 0 : index
      %c0_12 = arith.constant 0 : index
      %c0_13 = arith.constant 0 : index
      %30 = vector.load %arg4[%c0_10, %c0_11, %c0_12, %c0_13] : memref<1x2x8x128xf32, #tpu.memory_space<vmem>>, vector<1x1x8x128xf32>
      %31 = vector.shape_cast %30 : vector<1x1x8x128xf32> to vector<8x128xf32>
      %32 = arith.addf %31, %25 : vector<8x128xf32>
      %c0_14 = arith.constant 0 : index
      %c0_15 = arith.constant 0 : index
      %c0_16 = arith.constant 0 : index
      %c0_17 = arith.constant 0 : index
      %33 = vector.load %arg4[%c0_14, %c0_15, %c0_16, %c0_17] : memref<1x2x8x128xf32, #tpu.memory_space<vmem>>, vector<1x1x8x128xf32>
      %34 = vector.shape_cast %33 : vector<1x1x8x128xf32> to vector<8x128xf32>
      %35 = vector.shape_cast %32 : vector<8x128xf32> to vector<1x1x8x128xf32>
      tpu.vector_store %arg4[%c0_14, %c0_15, %c0_16, %c0_17], %35 {strides = array<i32>} : memref<1x2x8x128xf32, #tpu.memory_space<vmem>>, vector<1x1x8x128xf32>,
      %c0_18 = arith.constant 0 : index
      %c1 = arith.constant 1 : index
      %c0_19 = arith.constant 0 : index
      %c0_20 = arith.constant 0 : index
      %36 = vector.load %arg4[%c0_18, %c1, %c0_19, %c0_20] : memref<1x2x8x128xf32, #tpu.memory_space<vmem>>, vector<1x1x8x128xf32>
      %37 = vector.shape_cast %36 : vector<1x1x8x128xf32> to vector<8x128xf32>
      %38 = arith.addf %37, %29 : vector<8x128xf32>
      %c0_21 = arith.constant 0 : index
      %c1_22 = arith.constant 1 : index
      %c0_23 = arith.constant 0 : index
      %c0_24 = arith.constant 0 : index
      %39 = vector.load %arg4[%c0_21, %c1_22, %c0_23, %c0_24] : memref<1x2x8x128xf32, #tpu.memory_space<vmem>>, vector<1x1x8x128xf32>
      %40 = vector.shape_cast %39 : vector<1x1x8x128xf32> to vector<8x128xf32>
      %41 = vector.shape_cast %38 : vector<8x128xf32> to vector<1x1x8x128xf32>
      tpu.vector_store %arg4[%c0_21, %c1_22, %c0_23, %c0_24], %41 {strides = array<i32>} : memref<1x2x8x128xf32, #tpu.memory_space<vmem>>, vector<1x1x8x128xf32>,
    } else {
    }
    return
  }
  func.func @transform_0(%arg0: i32, %arg1: i32) -> (i32, i32) {
    %c1_i32 = arith.constant 1 : i32
    %0 = arith.muli %arg0, %c1_i32 : i32
    %1 = arith.addi %0, %arg1 : i32
    %c0_i32 = arith.constant 0 : i32
    %2 = arith.minsi %1, %c0_i32 : i32
    %c0_i32_0 = arith.constant 0 : i32
    %c0_i32_1 = arith.constant 0 : i32
    return %2, %c0_i32_0 : i32, i32
  }
  func.func @transform_1(%arg0: i32, %arg1: i32) -> (i32, i32) {
    %c1_i32 = arith.constant 1 : i32
    %0 = arith.muli %arg0, %c1_i32 : i32
    %1 = arith.addi %0, %arg1 : i32
    %c0_i32 = arith.constant 0 : i32
    %2 = arith.minsi %1, %c0_i32 : i32
    %c0_i32_0 = arith.constant 0 : i32
    %c0_i32_1 = arith.constant 0 : i32
    return %2, %c0_i32_0 : i32, i32
  }
  func.func @transform_2(%arg0: i32, %arg1: i32) -> (i32, i32, i32, i32) {
    %c0_i32 = arith.constant 0 : i32
    %c0_i32_0 = arith.constant 0 : i32
    %c0_i32_1 = arith.constant 0 : i32
    %c0_i32_2 = arith.constant 0 : i32
    return %arg0, %c0_i32, %c0_i32_0, %c0_i32_1 : i32, i32, i32, i32
  }
}

</mosaic_0001>

<llo_original>
// kernel: tpu_custom_call.1
$region0: #{tpu_custom_call.1}
  #allocation0 [shape = 'u32[]', space=smem, size = 0x4, offset = 0x4, fixed_abs, tag = 'smem constant byte address 0x4 - core index']
  #allocation1 [shape = 'u32[72,128]{1,0:T(1,128)}', space=vmem, size = 0x9000, scoped, tag = 'internal scratch']
  %s0 = inlined_call_operand.hbm [shape: f32[16,128], index: 0, kind: input, shape index: {}]
  %s1 = inlined_call_operand.hbm [shape: f32[16,128], index: 1, kind: input, shape index: {}]
  %s2 = inlined_call_operand.hbm [shape: f32[1,2,8,128], index: 2, kind: output, shape index: {}]
  %s3 = sld [smem:[#allocation0]]
  $region34: #{tpu_custom_call.1} parent=0
    _
  %s5 = ssub.s32 1, %s3
  %s6 = scalar_select 0, %s5, %s3
  $region1: #{tpu_custom_call.1} parent=0
    #allocation2 [shape = 'u8[8192]{0}', space=vmem, size = 0x2000, scoped, tag = 'input window, operand 0, single buffered']
    #allocation3 [shape = 's32[1]{0}', space=sflag, size = 0x4, scoped, tag = 'scoped memory for tpu_custom_call.1']
    #allocation4 [shape = 's32[1]{0}', space=sflag, size = 0x4, scoped, tag = 'scoped memory for tpu_custom_call.1']
    #allocation5 [shape = 'u8[8192]{0}', space=vmem, size = 0x2000, scoped, tag = 'input window, operand 1, single buffered']
    #allocation6 [shape = 's32[1]{0}', space=sflag, size = 0x4, scoped, tag = 'scoped memory for tpu_custom_call.1']
    #allocation7 [shape = 'u8[8192]{0}', space=vmem, size = 0x2000, scoped, tag = 'output window, operand 0, single buffered']
    %7 = vsyncpa [#allocation3], 0
    %8 = vsyncpa [#allocation6], 0
    %9 = vsyncpa [#allocation4], 0
    // Predicated region
    $region2: #{tpu_custom_call.1} parent=1 // pred_check
      _
    $region3: #{tpu_custom_call.1} parent=1 // pred_check_branch
      %11 = sbr.rel (0) target = $region5
    $region4: #{tpu_custom_call.1} parent=1 // pred_region
      %s12 = sadd.s32 0, 0
      %p13 = scmp.lt.s32.totalorder %s12, 0
      %s14 = scalar_select %p13, %s12, 0
      %s15 = smul.u32 2, %s14
      %17 = vsyncadd [#allocation3], 0
      %s18 = smul.addr %s15, 8
      %s19 = scalar_lea.hbm %s0, %s18
      %s20 = sshll.u32 %s19, 4
      %s21 = int_to_ptr.hbm [resolvable:$true] %s20
      %s22 = sshll.u32 [#allocation2], 4
      %s23 = int_to_ptr.vmem [resolvable:$true] %s22
      %28 = dma.hbm_to_vmem [thread:$0]  %s21, 256, %s23, [#allocation3], 128, 128, 8
    $region5: #{tpu_custom_call.1} parent=1 // pred_fallthru
      _
    // Predicated region
    $region6: #{tpu_custom_call.1} parent=1 // pred_check
      _
    $region7: #{tpu_custom_call.1} parent=1 // pred_check_branch
      %30 = sbr.rel (0) target = $region9
    $region8: #{tpu_custom_call.1} parent=1 // pred_region
      %s31 = sadd.s32 0, 0
      %p32 = scmp.lt.s32.totalorder %s31, 0
      %s33 = scalar_select %p32, %s31, 0
      %s34 = smul.u32 2, %s33
      %36 = vsyncadd [#allocation6], 0
      %s37 = smul.addr %s34, 8
      %s38 = scalar_lea.hbm %s1, %s37
      %s39 = sshll.u32 %s38, 4
      %s40 = int_to_ptr.hbm [resolvable:$true] %s39
      %s41 = sshll.u32 [#allocation5], 4
      %s42 = int_to_ptr.vmem [resolvable:$true] %s41
      %47 = dma.hbm_to_vmem [thread:$0]  %s40, 256, %s42, [#allocation6], 128, 128, 8
    $region9: #{tpu_custom_call.1} parent=1 // pred_fallthru
      _
    // Predicated region
    $region10: #{tpu_custom_call.1} parent=1 // pred_check
      _
    $region11: #{tpu_custom_call.1} parent=1 // pred_check_branch
      %49 = sbr.rel (0) target = $region13
    $region12: #{tpu_custom_call.1} parent=1 // pred_region
      %51 = dma.done [#allocation3], 256
    $region13: #{tpu_custom_call.1} parent=1 // pred_fallthru
      _
    // Predicated region
    $region14: #{tpu_custom_call.1} parent=1 // pred_check
      _
    $region15: #{tpu_custom_call.1} parent=1 // pred_check_branch
      %53 = sbr.rel (0) target = $region17
    $region16: #{tpu_custom_call.1} parent=1 // pred_region
      %55 = dma.done [#allocation6], 256
    $region17: #{tpu_custom_call.1} parent=1 // pred_fallthru
      _
    %s56 = sadd.s32 0, 0
    %p57 = scmp.lt.s32.totalorder %s56, 0
    %s58 = scalar_select %p57, %s56, 0
    %s59 = smul.u32 2, %s58
    %s60 = sadd.s32 0, 0
    %p61 = scmp.lt.s32.totalorder %s60, 0
    %s62 = scalar_select %p61, %s60, 0
    %s63 = smul.u32 2, %s62
    %s64 = sadd.s32 0, 0
    %p65 = scmp.eq.s32.totalorder 0, 0
    // Predicated region
    $region18: #{tpu_custom_call.1} parent=1 // pred_check
      %p66 = pneg %p65
    $region19: #{tpu_custom_call.1} parent=1 // pred_check_branch
      %68 = sbr.rel (%p66) target = $region21
    $region20: #{tpu_custom_call.1} parent=1 // pred_region
      %69 = vst [vmem:[#allocation7] sm:$0xff] 0.0
      %70 = vst [vmem:[#allocation7 + $0x8] sm:$0xff] 0.0
    $region21: #{tpu_custom_call.1} parent=1 // pred_fallthru
      _
    %p71 = scmp.lt.s32.totalorder %s64, 1
    // Predicated region
    $region22: #{tpu_custom_call.1} parent=1 // pred_check
      %p72 = pneg %p71
    $region23: #{tpu_custom_call.1} parent=1 // pred_check_branch
      %74 = sbr.rel (%p72) target = $region25
    $region24: #{tpu_custom_call.1} parent=1 // pred_region
      %v75 = vld [vmem:[#allocation2] sm:$0xff]
      %v76 = vld [vmem:[#allocation2 + $0x8] sm:$0xff]
      %v77 = vxor.u32 %v75, 2147483648
      %v78 = vxor.u32 %v76, 2147483648
      %v79 = vmul.f32 %v77, 1.442695
      %v80 = vpow.pop %v79
      %v81 = vmul.f32 %v78, 1.442695
      %v82 = vpow.pop %v81
      %v83 = vadd.f32 %v80, 1.0
      %v84 = vadd.f32 %v82, 1.0
      %v85 = vrcp.pop %v83
      %v86 = vmul.f32 %v83, %v85
      %v87 = vsub.f32 1.0, %v86
      %v88 = vmul.f32 %v85, %v87
      %v89 = vadd.f32 %v85, %v88
      %vm90 = vweird.f32 %v83
      %vm91 = vweird.f32 %v85
      %vm92 = vmor %vm90, %vm91
      %v93 = vsel %vm92, %v85, %v89
      %v94 = vand.u32 2147483647, %v83
      %vm95 = vcmp.eq.f32.partialorder %v94, 8.507059e+37
      %v96 = vand.u32 %v83, 2147483648
      %v97 = vor.u32 1.1754944e-38, %v96
      %v98 = vsel %vm95, %v97, %v93
      %v99 = vmul.f32 1.0, %v98
      %v100 = vrcp.pop %v84
      %v101 = vmul.f32 %v84, %v100
      %v102 = vsub.f32 1.0, %v101
      %v103 = vmul.f32 %v100, %v102
      %v104 = vadd.f32 %v100, %v103
      %vm105 = vweird.f32 %v84
      %vm106 = vweird.f32 %v100
      %vm107 = vmor %vm105, %vm106
      %v108 = vsel %vm107, %v100, %v104
      %v109 = vand.u32 2147483647, %v84
      %vm110 = vcmp.eq.f32.partialorder %v109, 8.507059e+37
      %v111 = vand.u32 %v84, 2147483648
      %v112 = vor.u32 1.1754944e-38, %v111
      %v113 = vsel %vm110, %v112, %v108
      %v114 = vmul.f32 1.0, %v113
      %v115 = vld [vmem:[#allocation5] sm:$0xff]
      %v116 = vld [vmem:[#allocation5 + $0x8] sm:$0xff]
      %v117 = vmul.f32 %v99, %v115
      %v118 = vmul.f32 %v114, %v116
      %v119 = vadd.f32 %v117, %v118
      %v120 = vadd.f32 %v119, 0.0
      %v121 = vadd.f32 %v99, %v115
      %v122 = vadd.f32 %v114, %v116
      %v123 = vadd.f32 %v121, %v122
      %v124 = vadd.f32 %v123, 0.0
      %v125 = vld [vmem:[#allocation7] sm:$0xff]
      %v126 = vadd.f32 %v125, %v120
      %127 = vst [vmem:[#allocation7] sm:$0xff] %v126
      %s128 = scalar_lea.vmem [#allocation7], 8
      %v129 = vld [vmem:[%s128] sm:$0xff]
      %v130 = vadd.f32 %v129, %v124
      %131 = vst [vmem:[%s128] sm:$0xff] %v130
    $region25: #{tpu_custom_call.1} parent=1 // pred_fallthru
      _
    // Predicated region
    $region26: #{tpu_custom_call.1} parent=1 // pred_check
      _
    $region27: #{tpu_custom_call.1} parent=1 // pred_check_branch
      %133 = sbr.rel (0) target = $region29
    $region28: #{tpu_custom_call.1} parent=1 // pred_region
      %135 = vsyncadd [#allocation4], 0
      %s136 = sshll.u32 [#allocation7], 4
      %s137 = int_to_ptr.vmem [resolvable:$true] %s136
      %s138 = sshll.u32 %s2, 4
      %s139 = int_to_ptr.hbm [resolvable:$true] %s138
      %144 = dma.vmem_to_hbm [thread:$0]  %s137, 256, %s139, [#allocation4], 128, 128, 8
    $region29: #{tpu_custom_call.1} parent=1 // pred_fallthru
      _
    // Predicated region
    $region30: #{tpu_custom_call.1} parent=1 // pred_check
      _
    $region31: #{tpu_custom_call.1} parent=1 // pred_check_branch
      %146 = sbr.rel (0) target = $region33
    $region32: #{tpu_custom_call.1} parent=1 // pred_region
      %148 = dma.done [#allocation4], 256
    $region33: #{tpu_custom_call.1} parent=1 // pred_fallthru
      _
    %149 = vsyncpa [#allocation3], 1
    %150 = vsyncpa [#allocation6], 1
    %151 = vsyncpa [#allocation4], 1

</llo_original>
